<compile_context>
chip_gen: v6e
topology: v6e:2x2x1
jax: 0.10.0
libtpu: 0.0.40
codegen_flags: <defaults>
</compile_context>

<pallas_src>
import jax
import jax.numpy as jnp
from jax.experimental import pallas as pl
from jax.experimental.pallas import tpu as pltpu


_SUBLANE_PACK = {4: 8, 2: 16, 1: 32}   # f32 / bf16 / int8 sublane packing


def _round_up(v, m):
    return (v + m - 1) // m * m


def _vmem_capacity_bytes():
    """Physical per-core VMEM, with a conservative (v7x = 64 MiB) fallback."""
    try:
        info = pltpu.get_tpu_info()
        for name in ("vmem_capacity_bytes", "vmem_size_bytes", "vmem_bytes"):
            cap = getattr(info, name, None)
            if cap:
                return int(cap)
    except Exception:
        pass
    return 64 << 20


def _pick_tiles(B, C, S, itemsize, w_bytes, b_tile=None, s_tile=None):
    """Pick (b_tile, s_tile, vmem_limit_bytes).

    Spatial tile first (as many 128-lane columns as a <=16 MiB x buffer allows
    for a single batch row), then the batch tile fills the remaining budget
    but is capped at ceil(B/2) so v7x's two TensorCores both get batch tiles.
    """
    pack = _SUBLANE_PACK.get(itemsize, 8)
    c_pad = _round_up(C, pack)              # true sublane footprint of the C axis

    vmem_cap = _vmem_capacity_bytes()
    # <= 2/3 of physical VMEM (v7x: ~42 of 64 MiB headroom-safe), never >64 MiB.
    vmem_limit = max(16 << 20, min(vmem_cap * 2 // 3, 64 << 20))

    # Reserve for (conservatively double-buffered) weights/biases, the f32
    # accumulator (b_tile <= 8) and compiler-internal scratch.
    reserved = 2 * w_bytes + 8 * c_pad * 128 * 4 + (2 << 20)
    per_buffer = max(1 << 20, min((vmem_limit - reserved) // 2, 16 << 20))

    if s_tile is None:
        if S <= 128:
            s_tile = S                       # full-dim block (last-dim exception)
        else:
            lane_bytes = c_pad * itemsize    # one batch row, one lane column
            max_lanes = max(128, (per_buffer // lane_bytes) // 128 * 128)
            s_tile = int(min((S // 128) * 128, max_lanes, 8192))

    if b_tile is None:
        per_b = c_pad * _round_up(s_tile, 128) * itemsize
        b_fit = max(1, per_buffer // per_b)
        # TODO(synk): for B == 1 on v7x one TensorCore idles; a parallel
        # partial-sum stage over the spatial axis + tiny combine would fix it.
        b_cap = max(1, min(8, -(-B // 2)))   # ceil(B/2), capped at 8
        b_tile = int(max(1, min(B, b_cap, b_fit)))

    return int(b_tile), int(s_tile), int(vmem_limit)


def _make_se_kernel(S, s_tile, num_s, chunk):
    inv_s = 1.0 / float(S)
    rem_last = S - (num_s - 1) * s_tile      # valid lanes in the last spatial tile

    def _accumulate(x_ref, acc_ref, valid):
        """Add the first `valid` lanes of this tile into the f32 accumulator.

        Pure VALU adds over lane-aligned `chunk`-wide slices; fully-invalid
        chunks are skipped statically and only the ragged chunk is masked.
        """
        acc = acc_ref[...]
        n_full = valid // chunk
        rem = valid % chunk
        for t in range(n_full):
            acc = acc + x_ref[:, :, t * chunk:(t + 1) * chunk].astype(jnp.float32)
        if rem:
            xc = x_ref[:, :, n_full * chunk:(n_full + 1) * chunk].astype(jnp.float32)
            lane = jax.lax.broadcasted_iota(jnp.int32, xc.shape, dimension=2)
            acc = acc + jnp.where(lane < rem, xc, 0.0)
        acc_ref[...] = acc

    def kernel(x_ref, w1_ref, b1_ref, w2_ref, b2_ref, out_ref, acc_ref):
        j = pl.program_id(1)

        @pl.when(j == 0)
        def _():
            acc_ref[...] = jnp.zeros_like(acc_ref)

        if rem_last == s_tile:
            # Every spatial tile is full: single mask-free accumulate path.
            _accumulate(x_ref, acc_ref, s_tile)
        else:
            @pl.when(j < num_s - 1)
            def _():
                _accumulate(x_ref, acc_ref, s_tile)        # interior: no mask

            @pl.when(j == num_s - 1)
            def _():
                _accumulate(x_ref, acc_ref, rem_last)      # ragged tail only

        @pl.when(j == num_s - 1)
        def _():
            # Single cross-lane reduce + relayout, once per batch tile.
            # Note: padded rows of a partial batch tile carry garbage through
            # this epilogue; they are discarded by the masked output write.
            mean = jnp.sum(acc_ref[...], axis=-1) * inv_s               # (b_tile, C)
            h = jnp.dot(mean, w1_ref[...].astype(jnp.float32),
                        preferred_element_type=jnp.float32)
            h = jnp.maximum(h + b1_ref[...].astype(jnp.float32), 0.0)
            o = jnp.dot(h, w2_ref[...].astype(jnp.float32),
                        preferred_element_type=jnp.float32)
            o = jax.nn.sigmoid(o + b2_ref[...].astype(jnp.float32))
            out_ref[...] = o[:, None, :].astype(out_ref.dtype)

    return kernel


def se_layer(x, w1, b1, w2, b2, out_planes, *, b_tile=None, s_tile=None):
    """x: (B, C, H, W). Returns the SE gate of shape (B, out_planes, 1, 1)."""
    B, C, H, W = x.shape
    S = H * W
    hidden = w1.shape[1]
    x3 = x.reshape(B, C, S)
    b1_2d = b1.reshape(1, hidden)
    b2_2d = b2.reshape(1, out_planes)

    itemsize = jnp.dtype(x.dtype).itemsize
    w_bytes = (w1.size * jnp.dtype(w1.dtype).itemsize
               + w2.size * jnp.dtype(w2.dtype).itemsize
               + (hidden + out_planes) * 4)

    # Sanitize user overrides: spatial tiles must be 128-lane aligned (or the
    # full spatial extent); batch tiles must lie in [1, B].
    if s_tile is not None:
        s_tile = min(int(s_tile), S)
        s_tile = S if S <= 128 else max(128, (s_tile // 128) * 128)
    if b_tile is not None:
        b_tile = max(1, min(int(b_tile), B))

    b_tile, s_tile, vmem_limit = _pick_tiles(
        B, C, S, itemsize, w_bytes, b_tile=b_tile, s_tile=s_tile)

    num_b = pl.cdiv(B, b_tile)
    num_s = pl.cdiv(S, s_tile)
    chunk = 128 if s_tile >= 128 else s_tile

    kernel = _make_se_kernel(S, s_tile, num_s, chunk)

    flops = B * C * S + 2 * B * C * hidden + 2 * B * hidden * out_planes
    bytes_accessed = x3.size * itemsize + w_bytes + B * out_planes * itemsize

    out = pl.pallas_call(
        kernel,
        # 3-D output keeps the batch tile as a leading (unconstrained) block
        # dim and the lane axis dense; reshaped to (B, out, 1, 1) below.
        out_shape=jax.ShapeDtypeStruct((B, 1, out_planes), x.dtype),
        grid=(num_b, num_s),
        in_specs=[
            pl.BlockSpec((b_tile, C, s_tile), lambda i, j: (i, 0, j)),
            pl.BlockSpec((C, hidden), lambda i, j: (0, 0)),
            pl.BlockSpec((1, hidden), lambda i, j: (0, 0)),
            pl.BlockSpec((hidden, out_planes), lambda i, j: (0, 0)),
            pl.BlockSpec((1, out_planes), lambda i, j: (0, 0)),
        ],
        out_specs=pl.BlockSpec((b_tile, 1, out_planes), lambda i, j: (i, 0, 0)),
        scratch_shapes=[pltpu.VMEM((b_tile, C, chunk), jnp.float32)],
        compiler_params=pltpu.CompilerParams(
            dimension_semantics=("parallel", "arbitrary"),
            vmem_limit_bytes=vmem_limit,
        ),
        cost_estimate=pl.CostEstimate(
            flops=flops,
            transcendentals=B * out_planes,
            bytes_accessed=bytes_accessed,
        ),
    )(x3, w1, b1_2d, w2, b2_2d)

    return out.reshape(B, out_planes, 1, 1)


def make_params(key, in_planes, out_planes, reduction=16):
    """Deterministic synthetic parameters for the two Linear layers.

    Matches the module spec: hidden = out_planes // reduction. PyTorch
    nn.Linear stores weight as (out, in) and computes x @ W.T + b; we store
    weights pre-transposed as (in, out) for the kernel's matmuls.
    """
    hidden = out_planes // reduction
    k1, k2, k3, k4 = jax.random.split(key, 4)
    s1 = 1.0 / (in_planes ** 0.5)
    s2 = 1.0 / (hidden ** 0.5)
    w1 = jax.random.uniform(k1, (in_planes, hidden), jnp.float32, -s1, s1)
    b1 = jax.random.uniform(k2, (hidden,), jnp.float32, -s1, s1)
    w2 = jax.random.uniform(k3, (hidden, out_planes), jnp.float32, -s2, s2)
    b2 = jax.random.uniform(k4, (out_planes,), jnp.float32, -s2, s2)
    return w1, b1, w2, b2


if __name__ == "__main__":
    # Small shapes consistent with the module: in_planes=C=4, out_planes=32,
    # reduction=16 -> hidden=2.
    B, C, H, W = 2, 4, 16, 16
    out_planes, reduction = 32, 16

    key = jax.random.PRNGKey(0)
    kx, kp, kx2 = jax.random.split(key, 3)
    x = jax.random.normal(kx, (B, C, H, W), dtype=jnp.float32)
    w1, b1, w2, b2 = make_params(kp, C, out_planes, reduction)

    def ref(xv):
        y = jnp.mean(xv, axis=(2, 3))                      # global avg pool
        y = jnp.maximum(y @ w1 + b1, 0.0)                  # Linear + ReLU
        y = jax.nn.sigmoid(y @ w2 + b2)                    # Linear + Sigmoid
        return y.reshape(xv.shape[0], out_planes, 1, 1)

    # 1) forced s_tile=128 -> grid (2, 2): exercises init/accumulate/finalize
    #    across spatial steps and two parallel batch tiles.
    y = jax.block_until_ready(se_layer(x, w1, b1, w2, b2, out_planes, s_tile=128))
    assert y.shape == (B, out_planes, 1, 1)
    assert jnp.allclose(y, ref(x), atol=1e-5, rtol=1e-5)

    # 2) default tile selection (single spatial tile at this size).
    y2 = jax.block_until_ready(se_layer(x, w1, b1, w2, b2, out_planes))
    assert jnp.allclose(y2, ref(x), atol=1e-5, rtol=1e-5)

    # 3) ragged spatial extent (15x15 -> S=225): exercises the masked tail tile.
    x_odd = jax.random.normal(kx2, (B, C, 15, 15), dtype=jnp.float32)
    y3 = jax.block_until_ready(
        se_layer(x_odd, w1, b1, w2, b2, out_planes, s_tile=128))
    assert jnp.allclose(y3, ref(x_odd), atol=1e-5, rtol=1e-5)

    print("KERNEL_OK")
</pallas_src>

<mosaic_0001>
module attributes {stable_mosaic.version = 11 : i64} {
  func.func @kernel(%arg0: i32, %arg1: i32, %arg2: memref<1x4x128xf32, #tpu.memory_space<vmem>>, %arg3: memref<4x2xf32, #tpu.memory_space<vmem>>, %arg4: memref<1x2xf32, #tpu.memory_space<vmem>>, %arg5: memref<2x32xf32, #tpu.memory_space<vmem>>, %arg6: memref<1x32xf32, #tpu.memory_space<vmem>>, %arg7: memref<1x1x32xf32, #tpu.memory_space<vmem>>, %arg8: memref<1x4x128xf32, #tpu.memory_space<vmem>>) attributes {dimension_semantics = [#tpu.dimension_semantics<parallel>, #tpu.dimension_semantics<arbitrary>], iteration_bounds = array<i64: 2, 2>, scalar_prefetch = 0 : i64, scratch_operands = 1 : i64, tpu.core_type = #tpu.core_type<tc>, window_params = [{transform_indices = @transform_0, window_bounds = array<i64: 1, 4, 128>}, {pipeline_mode = #tpu.pipeline_mode<synchronous>, transform_indices = @transform_1, window_bounds = array<i64: 4, 2>}, {pipeline_mode = #tpu.pipeline_mode<synchronous>, transform_indices = @transform_2, window_bounds = array<i64: 1, 2>}, {pipeline_mode = #tpu.pipeline_mode<synchronous>, transform_indices = @transform_3, window_bounds = array<i64: 2, 32>}, {pipeline_mode = #tpu.pipeline_mode<synchronous>, transform_indices = @transform_4, window_bounds = array<i64: 1, 32>}, {transform_indices = @transform_5, window_bounds = array<i64: 1, 1, 32>}]} {
    %c0_i32 = arith.constant 0 : i32
    %0 = arith.cmpi eq, %arg1, %c0_i32 : i32
    %1 = arith.extui %0 : i1 to i32
    %c0_i32_0 = arith.constant 0 : i32
    %2 = arith.cmpi ne, %1, %c0_i32_0 : i32
    scf.if %2 {
      %cst = arith.constant 0.000000e+00 : f32
      %10 = vector.broadcast %cst : f32 to vector<1x4x128xf32>
      %c0_10 = arith.constant 0 : index
      %c0_11 = arith.constant 0 : index
      %c0_12 = arith.constant 0 : index
      %11 = vector.load %arg8[%c0_10, %c0_11, %c0_12] : memref<1x4x128xf32, #tpu.memory_space<vmem>>, vector<1x4x128xf32>
      tpu.vector_store %arg8[%c0_10, %c0_11, %c0_12], %10 {strides = array<i32>} : memref<1x4x128xf32, #tpu.memory_space<vmem>>, vector<1x4x128xf32>,
    } else {
    }
    %c0 = arith.constant 0 : index
    %c0_1 = arith.constant 0 : index
    %c0_2 = arith.constant 0 : index
    %3 = vector.load %arg8[%c0, %c0_1, %c0_2] : memref<1x4x128xf32, #tpu.memory_space<vmem>>, vector<1x4x128xf32>
    %c0_3 = arith.constant 0 : index
    %c0_4 = arith.constant 0 : index
    %c0_5 = arith.constant 0 : index
    %4 = vector.load %arg2[%c0_3, %c0_4, %c0_5] : memref<1x4x128xf32, #tpu.memory_space<vmem>>, vector<1x4x128xf32>
    %5 = arith.addf %3, %4 : vector<1x4x128xf32>
    %c0_6 = arith.constant 0 : index
    %c0_7 = arith.constant 0 : index
    %c0_8 = arith.constant 0 : index
    %6 = vector.load %arg8[%c0_6, %c0_7, %c0_8] : memref<1x4x128xf32, #tpu.memory_space<vmem>>, vector<1x4x128xf32>
    tpu.vector_store %arg8[%c0_6, %c0_7, %c0_8], %5 {strides = array<i32>} : memref<1x4x128xf32, #tpu.memory_space<vmem>>, vector<1x4x128xf32>,
    %c1_i32 = arith.constant 1 : i32
    %7 = arith.cmpi eq, %arg1, %c1_i32 : i32
    %8 = arith.extui %7 : i1 to i32
    %c0_i32_9 = arith.constant 0 : i32
    %9 = arith.cmpi ne, %8, %c0_i32_9 : i32
    scf.if %9 {
      %c0_10 = arith.constant 0 : index
      %c0_11 = arith.constant 0 : index
      %c0_12 = arith.constant 0 : index
      %10 = vector.load %arg8[%c0_10, %c0_11, %c0_12] : memref<1x4x128xf32, #tpu.memory_space<vmem>>, vector<1x4x128xf32>
      %cst = arith.constant dense<0.000000e+00> : vector<1x4xf32>
      %11 = vector.multi_reduction <add>, %10, %cst [2] : vector<1x4x128xf32> to vector<1x4xf32>
      %cst_13 = arith.constant 3.906250e-03 : f32
      %12 = vector.broadcast %cst_13 : f32 to vector<1x4xf32>
      %13 = arith.mulf %11, %12 : vector<1x4xf32>
      %c0_14 = arith.constant 0 : index
      %c0_15 = arith.constant 0 : index
      %14 = vector.load %arg3[%c0_14, %c0_15] : memref<4x2xf32, #tpu.memory_space<vmem>>, vector<4x2xf32>
      %cst_16 = arith.constant dense<0.000000e+00> : vector<1x2xf32>
      %15 = tpu.matmul %13, %14, %cst_16 {dimension_numbers = #tpu.dot_dimension_numbers<[1], [0], [0], [1], [0, 0, 1, 1], [], []>} : vector<1x4xf32>, vector<4x2xf32>, vector<1x2xf32> -> vector<1x2xf32>
      %c0_17 = arith.constant 0 : index
      %c0_18 = arith.constant 0 : index
      %16 = vector.load %arg4[%c0_17, %c0_18] : memref<1x2xf32, #tpu.memory_space<vmem>>, vector<1x2xf32>
      %17 = arith.addf %15, %16 : vector<1x2xf32>
      %cst_19 = arith.constant 0.000000e+00 : f32
      %18 = vector.broadcast %cst_19 : f32 to vector<1x2xf32>
      %19 = arith.maximumf %17, %18 : vector<1x2xf32>
      %c0_20 = arith.constant 0 : index
      %c0_21 = arith.constant 0 : index
      %20 = vector.load %arg5[%c0_20, %c0_21] : memref<2x32xf32, #tpu.memory_space<vmem>>, vector<2x32xf32>
      %cst_22 = arith.constant dense<0.000000e+00> : vector<1x32xf32>
      %21 = tpu.matmul %19, %20, %cst_22 {dimension_numbers = #tpu.dot_dimension_numbers<[1], [0], [0], [1], [0, 0, 1, 1], [], []>} : vector<1x2xf32>, vector<2x32xf32>, vector<1x32xf32> -> vector<1x32xf32>
      %c0_23 = arith.constant 0 : index
      %c0_24 = arith.constant 0 : index
      %22 = vector.load %arg6[%c0_23, %c0_24] : memref<1x32xf32, #tpu.memory_space<vmem>>, vector<1x32xf32>
      %23 = arith.addf %21, %22 : vector<1x32xf32>
      %24 = arith.negf %23 : vector<1x32xf32>
      %25 = math.exp %24 : vector<1x32xf32>
      %cst_25 = arith.constant 1.000000e+00 : f32
      %26 = vector.broadcast %cst_25 : f32 to vector<1x32xf32>
      %27 = arith.addf %26, %25 : vector<1x32xf32>
      %28 = arith.divf %26, %27 : vector<1x32xf32>
      %29 = vector.shape_cast %28 : vector<1x32xf32> to vector<1x1x32xf32>
      %c0_26 = arith.constant 0 : index
      %c0_27 = arith.constant 0 : index
      %c0_28 = arith.constant 0 : index
      %30 = vector.load %arg7[%c0_26, %c0_27, %c0_28] : memref<1x1x32xf32, #tpu.memory_space<vmem>>, vector<1x1x32xf32>
      tpu.vector_store %arg7[%c0_26, %c0_27, %c0_28], %29 {strides = array<i32>} : memref<1x1x32xf32, #tpu.memory_space<vmem>>, vector<1x1x32xf32>,
    } else {
    }
    return
  }
  func.func @transform_0(%arg0: i32, %arg1: i32) -> (i32, i32, i32) {
    %c0_i32 = arith.constant 0 : i32
    %c0_i32_0 = arith.constant 0 : i32
    return %arg0, %c0_i32, %arg1 : i32, i32, i32
  }
  func.func @transform_1(%arg0: i32, %arg1: i32) -> (i32, i32) {
    %c0_i32 = arith.constant 0 : i32
    %c0_i32_0 = arith.constant 0 : i32
    %c0_i32_1 = arith.constant 0 : i32
    return %c0_i32, %c0_i32_0 : i32, i32
  }
  func.func @transform_2(%arg0: i32, %arg1: i32) -> (i32, i32) {
    %c0_i32 = arith.constant 0 : i32
    %c0_i32_0 = arith.constant 0 : i32
    %c0_i32_1 = arith.constant 0 : i32
    return %c0_i32, %c0_i32_0 : i32, i32
  }
  func.func @transform_3(%arg0: i32, %arg1: i32) -> (i32, i32) {
    %c0_i32 = arith.constant 0 : i32
    %c0_i32_0 = arith.constant 0 : i32
    %c0_i32_1 = arith.constant 0 : i32
    return %c0_i32, %c0_i32_0 : i32, i32
  }
  func.func @transform_4(%arg0: i32, %arg1: i32) -> (i32, i32) {
    %c0_i32 = arith.constant 0 : i32
    %c0_i32_0 = arith.constant 0 : i32
    %c0_i32_1 = arith.constant 0 : i32
    return %c0_i32, %c0_i32_0 : i32, i32
  }
  func.func @transform_5(%arg0: i32, %arg1: i32) -> (i32, i32, i32) {
    %c0_i32 = arith.constant 0 : i32
    %c0_i32_0 = arith.constant 0 : i32
    %c0_i32_1 = arith.constant 0 : i32
    return %arg0, %c0_i32, %c0_i32_0 : i32, i32, i32
  }
}

</mosaic_0001>

<llo_original>
// kernel: tpu_custom_call.1
$region0: #{tpu_custom_call.1}
  #allocation0 [shape = 'u32[]', space=smem, size = 0x4, offset = 0x4, fixed_abs, tag = 'smem constant byte address 0x4 - core index']
  #allocation1 [shape = 'u32[144,128]{1,0:T(1,128)}', space=vmem, size = 0x12000, scoped, tag = 'internal scratch']
  #allocation2 [shape = 'f32[1,4,128]{2,1,0:T(4,128)}', space=vmem, size = 0x800, scoped, tag = 'scratch operand']
  %s0 = inlined_call_operand.hbm [shape: f32[2,4,256], index: 0, kind: input, shape index: {}]
  %s1 = inlined_call_operand.vmem [shape: f32[4,2], index: 1, kind: input, shape index: {}]
  %s2 = inlined_call_operand.vmem [shape: f32[1,2], index: 2, kind: input, shape index: {}]
  %s3 = inlined_call_operand.vmem [shape: f32[2,32], index: 3, kind: input, shape index: {}]
  %s4 = inlined_call_operand.vmem [shape: f32[1,32], index: 4, kind: input, shape index: {}]
  %s5 = inlined_call_operand.hbm [shape: f32[2,1,32], index: 5, kind: output, shape index: {}]
  %s6 = sld [smem:[#allocation0]]
  $region65: #{tpu_custom_call.1} parent=0
    _
  %s8 = ssub.s32 1, %s6
  %s9 = scalar_select 0, %s8, %s6
  $region1: #{tpu_custom_call.1} parent=0
    #allocation3 [shape = 'u8[4096]{0}', space=vmem, size = 0x1000, scoped, tag = 'input window, operand 0']
    #allocation4 [shape = 's32[2]{0}', space=sflag, size = 0x8, scoped, tag = 'scoped memory for tpu_custom_call.1']
    #allocation5 [shape = 's32[2]{0}', space=sflag, size = 0x8, scoped, tag = 'scoped memory for tpu_custom_call.1']
    #allocation6 [shape = 'u8[1024]{0}', space=vmem, size = 0x400, scoped, tag = 'output window, operand 0']
    %10 = vsyncpa [#allocation4], 0
    %s11 = scalar_lea.sflag [#allocation4], 1
    %12 = vsyncpa %s11, 0
    %13 = vsyncpa [#allocation5], 0
    %s14 = scalar_lea.sflag [#allocation5], 1
    %15 = vsyncpa %s14, 0
    loop: start=0, step=1, limit=6
    $region2: #{tpu_custom_call.1} parent=1 // loop_pre_header
      _
    $region3: #{tpu_custom_call.1} parent=1 // loop_header
      %s17 = sphi 0, %s21
      %p18 = scmp.ge.s32.totalorder %s17, 6
      %s24 = sphi 0, %s36
      %s25 = sphi 0, %s32
      %s26 = sphi 0, %s24
      %s27 = sphi 0, %s25
      %s28 = sphi 0, %s26
      %s29 = sphi 0, %s27
      %s41 = sphi 0, %s43
      %s44 = sphi 0, %s41
      %s45 = sphi 0, %s44
      %s61 = sphi 0, %s45
      %s65 = sphi 0, %s65
      %s67 = sphi 0, %s65
      %s68 = sphi 0, %s67
      %s82 = sphi 0, %s68
      %s86 = sphi 0, %s86
      %s88 = sphi 0, %s86
      %s89 = sphi 0, %s88
      %s103 = sphi 0, %s89
      %s107 = sphi 0, %s107
      %s109 = sphi 0, %s107
      %s110 = sphi 0, %s109
      %s124 = sphi 0, %s110
      %s128 = sphi 0, %s128
      %s130 = sphi 0, %s128
      %s131 = sphi 0, %s130
      %s145 = sphi 0, %s131
      %s151 = sphi 0, %s153
      %s154 = sphi 0, %s151
      %s155 = sphi 0, %s154
      %s171 = sphi 0, %s155
    $region4: #{tpu_custom_call.1} parent=1 // loop_header_branch
      %20 = sbr.rel (%p18) target = $region8
    $region5: #{tpu_custom_call.1} parent=1 // loop_body
      %s22 = ssub.s32 %s17, 1
      %s23 = ssub.s32 %s17, 2
      %s30 = sadd.s32 1, %s25
      %p31 = scmp.ge.s32.totalorder %s30, 2
      %s32 = scalar_select %p31, 0, %s30
      %s33 = sadd.s32 1, %s24
      %s34 = scalar_select %p31, %s33, %s24
      %p35 = scmp.ge.s32.totalorder %s34, 2
      %s36 = scalar_select %p35, 0, %s34
      %s37 = ssub.s32 %s24, %s36
      %s38 = ssub.s32 %s25, %s32
      %s39 = sor.u32 %s37, %s38
      %p40 = scmp.eq.s32.totalorder %s39, 0
      %s42 = sadd.s32 %s41, 1
      %s43 = scalar_select %p40, %s41, %s42
      %p46 = pneg %p40
      %p47 = scmp.eq.s32.totalorder %s17, 3
      %p48 = por %p46, %p47
      %p49 = scmp.ne.s32.totalorder %s41, %s44
      %p50 = scmp.eq.s32.totalorder %s17, 0
      %p51 = por %p49, %p50
      %p52 = scmp.ne.s32.totalorder %s41, %s44
      %p53 = scmp.eq.s32.totalorder %s22, 3
      %p54 = por %p52, %p53
      %p55 = scmp.ne.s32.totalorder %s44, %s45
      %p56 = scmp.eq.s32.totalorder %s22, 0
      %p57 = por %p55, %p56
      %p58 = scmp.ne.s32.totalorder %s44, %s45
      %p59 = scmp.eq.s32.totalorder %s23, 3
      %p60 = por %p58, %p59
      %p62 = scmp.ne.s32.totalorder %s45, %s61
      %p63 = scmp.eq.s32.totalorder %s23, 0
      %p64 = por %p62, %p63
      %s66 = sadd.s32 %s65, 1
      %p69 = scmp.eq.s32.totalorder %s17, 3
      %p70 = scmp.ne.s32.totalorder %s65, %s67
      %p71 = scmp.eq.s32.totalorder %s17, 0
      %p72 = por %p70, %p71
      %p73 = scmp.ne.s32.totalorder %s65, %s67
      %p74 = scmp.eq.s32.totalorder %s22, 3
      %p75 = por %p73, %p74
      %p76 = scmp.ne.s32.totalorder %s67, %s68
      %p77 = scmp.eq.s32.totalorder %s22, 0
      %p78 = por %p76, %p77
      %p79 = scmp.ne.s32.totalorder %s67, %s68
      %p80 = scmp.eq.s32.totalorder %s23, 3
      %p81 = por %p79, %p80
      %p83 = scmp.ne.s32.totalorder %s68, %s82
      %p84 = scmp.eq.s32.totalorder %s23, 0
      %p85 = por %p83, %p84
      %s87 = sadd.s32 %s86, 1
      %p90 = scmp.eq.s32.totalorder %s17, 3
      %p91 = scmp.ne.s32.totalorder %s86, %s88
      %p92 = scmp.eq.s32.totalorder %s17, 0
      %p93 = por %p91, %p92
      %p94 = scmp.ne.s32.totalorder %s86, %s88
      %p95 = scmp.eq.s32.totalorder %s22, 3
      %p96 = por %p94, %p95
      %p97 = scmp.ne.s32.totalorder %s88, %s89
      %p98 = scmp.eq.s32.totalorder %s22, 0
      %p99 = por %p97, %p98
      %p100 = scmp.ne.s32.totalorder %s88, %s89
      %p101 = scmp.eq.s32.totalorder %s23, 3
      %p102 = por %p100, %p101
      %p104 = scmp.ne.s32.totalorder %s89, %s103
      %p105 = scmp.eq.s32.totalorder %s23, 0
      %p106 = por %p104, %p105
      %s108 = sadd.s32 %s107, 1
      %p111 = scmp.eq.s32.totalorder %s17, 3
      %p112 = scmp.ne.s32.totalorder %s107, %s109
      %p113 = scmp.eq.s32.totalorder %s17, 0
      %p114 = por %p112, %p113
      %p115 = scmp.ne.s32.totalorder %s107, %s109
      %p116 = scmp.eq.s32.totalorder %s22, 3
      %p117 = por %p115, %p116
      %p118 = scmp.ne.s32.totalorder %s109, %s110
      %p119 = scmp.eq.s32.totalorder %s22, 0
      %p120 = por %p118, %p119
      %p121 = scmp.ne.s32.totalorder %s109, %s110
      %p122 = scmp.eq.s32.totalorder %s23, 3
      %p123 = por %p121, %p122
      %p125 = scmp.ne.s32.totalorder %s110, %s124
      %p126 = scmp.eq.s32.totalorder %s23, 0
      %p127 = por %p125, %p126
      %s129 = sadd.s32 %s128, 1
      %p132 = scmp.eq.s32.totalorder %s17, 3
      %p133 = scmp.ne.s32.totalorder %s128, %s130
      %p134 = scmp.eq.s32.totalorder %s17, 0
      %p135 = por %p133, %p134
      %p136 = scmp.ne.s32.totalorder %s128, %s130
      %p137 = scmp.eq.s32.totalorder %s22, 3
      %p138 = por %p136, %p137
      %p139 = scmp.ne.s32.totalorder %s130, %s131
      %p140 = scmp.eq.s32.totalorder %s22, 0
      %p141 = por %p139, %p140
      %p142 = scmp.ne.s32.totalorder %s130, %s131
      %p143 = scmp.eq.s32.totalorder %s23, 3
      %p144 = por %p142, %p143
      %p146 = scmp.ne.s32.totalorder %s131, %s145
      %p147 = scmp.eq.s32.totalorder %s23, 0
      %p148 = por %p146, %p147
      %s149 = ssub.s32 %s24, %s36
      %p150 = scmp.eq.s32.totalorder %s149, 0
      %s152 = sadd.s32 %s151, 1
      %s153 = scalar_select %p150, %s151, %s152
      %p156 = pneg %p150
      %p157 = scmp.eq.s32.totalorder %s17, 3
      %p158 = por %p156, %p157
      %p159 = scmp.ne.s32.totalorder %s151, %s154
      %p160 = scmp.eq.s32.totalorder %s17, 0
      %p161 = por %p159, %p160
      %p162 = scmp.ne.s32.totalorder %s151, %s154
      %p163 = scmp.eq.s32.totalorder %s22, 3
      %p164 = por %p162, %p163
      %p165 = scmp.ne.s32.totalorder %s154, %s155
      %p166 = scmp.eq.s32.totalorder %s22, 0
      %p167 = por %p165, %p166
      %p168 = scmp.ne.s32.totalorder %s154, %s155
      %p169 = scmp.eq.s32.totalorder %s23, 3
      %p170 = por %p168, %p169
      %p172 = scmp.ne.s32.totalorder %s155, %s171
      %p173 = scmp.eq.s32.totalorder %s23, 0
      %p174 = por %p172, %p173
      %p175 = scmp.le.s32.totalorder 1, %s17
      %p176 = scmp.lt.s32.totalorder %s17, 5
      %p177 = pnand %p175, %p176
      %p178 = pneg %p177
      // Predicated region
      $region9: #{tpu_custom_call.1} parent=5 // pred_check
        _
      $region10: #{tpu_custom_call.1} parent=5 // pred_check_branch
        %180 = sbr.rel (%p177) target = $region12
      $region11: #{tpu_custom_call.1} parent=5 // pred_region
        %s181 = ssub.s32 %s17, 1
        // Predicated region
        $region13: #{tpu_custom_call.1} parent=11 // pred_check
          %p182 = pneg %p78
        $region14: #{tpu_custom_call.1} parent=11 // pred_check_branch
          %184 = sbr.rel (%p182) target = $region16
        $region15: #{tpu_custom_call.1} parent=11 // pred_region
          _
        $region16: #{tpu_custom_call.1} parent=11 // pred_fallthru
          _
        // Predicated region
        $region17: #{tpu_custom_call.1} parent=11 // pred_check
          %p185 = pneg %p99
        $region18: #{tpu_custom_call.1} parent=11 // pred_check_branch
          %187 = sbr.rel (%p185) target = $region20
        $region19: #{tpu_custom_call.1} parent=11 // pred_region
          _
        $region20: #{tpu_custom_call.1} parent=11 // pred_fallthru
          _
        // Predicated region
        $region21: #{tpu_custom_call.1} parent=11 // pred_check
          %p188 = pneg %p120
        $region22: #{tpu_custom_call.1} parent=11 // pred_check_branch
          %190 = sbr.rel (%p188) target = $region24
        $region23: #{tpu_custom_call.1} parent=11 // pred_region
          _
        $region24: #{tpu_custom_call.1} parent=11 // pred_fallthru
          _
        // Predicated region
        $region25: #{tpu_custom_call.1} parent=11 // pred_check
          %p191 = pneg %p141
        $region26: #{tpu_custom_call.1} parent=11 // pred_check_branch
          %193 = sbr.rel (%p191) target = $region28
        $region27: #{tpu_custom_call.1} parent=11 // pred_region
          _
        $region28: #{tpu_custom_call.1} parent=11 // pred_fallthru
          _
      $region12: #{tpu_custom_call.1} parent=5 // pred_fallthru
        _
      %p194 = scmp.lt.s32.totalorder %s17, 4
      // Predicated region
      $region29: #{tpu_custom_call.1} parent=5 // pred_check
        %p195 = pneg %p194
      $region30: #{tpu_custom_call.1} parent=5 // pred_check_branch
        %197 = sbr.rel (%p195) target = $region32
      $region31: #{tpu_custom_call.1} parent=5 // pred_region
        // Predicated region
        $region33: #{tpu_custom_call.1} parent=31 // pred_check
          %p198 = pneg %p51
        $region34: #{tpu_custom_call.1} parent=31 // pred_check_branch
          %200 = sbr.rel (%p198) target = $region36
        $region35: #{tpu_custom_call.1} parent=31 // pred_region
          %s201 = sand.u32 %s41, 1
          %s202 = scalar_lea.sflag [#allocation4], %s201
          %s203 = sand.u32 %s41, 1
          %s204 = smul.addr %s203, 4
          %s205 = scalar_lea.vmem [#allocation3], %s204
          %s207 = ssub.s32 64, 64
          %208 = vsyncadd %s202, %s207
          %s209 = smul.addr %s24, 2
          %s210 = sadd.s32 %s25, %s209
          %s211 = smul.addr %s210, 64
          %s212 = scalar_lea.hbm %s0, %s211
          %s214 = sshll.u32 %s205, 4
          %s215 = int_to_ptr.vmem [resolvable:$true] %s214
          %217 = dma.hbm_to_vmem [thread:$0]  %s212, 64, %s215, %s202
        $region36: #{tpu_custom_call.1} parent=31 // pred_fallthru
          _
      $region32: #{tpu_custom_call.1} parent=5 // pred_fallthru
        _
      %p218 = scmp.le.s32.totalorder 1, %s17
      %p219 = scmp.lt.s32.totalorder %s17, 5
      %p220 = pnand %p218, %p219
      %p221 = pneg %p220
      // Predicated region
      $region37: #{tpu_custom_call.1} parent=5 // pred_check
        _
      $region38: #{tpu_custom_call.1} parent=5 // pred_check_branch
        %223 = sbr.rel (%p220) target = $region40
      $region39: #{tpu_custom_call.1} parent=5 // pred_region
        %s224 = ssub.s32 %s17, 1
        %s225 = sand.u32 %s44, 1
        %s226 = scalar_lea.sflag [#allocation4], %s225
        %s227 = sand.u32 %s44, 1
        %s228 = smul.addr %s227, 4
        %s229 = scalar_lea.vmem [#allocation3], %s228
        // Predicated region
        $region41: #{tpu_custom_call.1} parent=39 // pred_check
          %p230 = pneg %p57
        $region42: #{tpu_custom_call.1} parent=39 // pred_check_branch
          %232 = sbr.rel (%p230) target = $region44
        $region43: #{tpu_custom_call.1} parent=39 // pred_region
          %233 = dma.done %s226, 64
        $region44: #{tpu_custom_call.1} parent=39 // pred_fallthru
          _
        %s234 = sand.u32 %s44, 1
        %s235 = scalar_lea.sflag [#allocation4], %s234
        %s236 = sand.u32 %s44, 1
        %s237 = smul.addr %s236, 4
        %s238 = scalar_lea.vmem [#allocation3], %s237
        %p239 = pneg %p57
        %p240 = pneg %p54
        %p241 = pneg %p78
        %p242 = pneg %p75
        %p243 = pneg %p99
        %p244 = pneg %p96
        %p245 = pneg %p120
        %p246 = pneg %p117
        %p247 = pneg %p141
        %p248 = pneg %p138
        %p249 = pneg %p167
        %p250 = pneg %p164
        %s251 = sand.u32 %s154, 1
        %s252 = scalar_lea.sflag [#allocation5], %s251
        %s253 = sand.u32 %s154, 1
        %s254 = scalar_lea.vmem [#allocation6], %s253
        %p255 = scmp.eq.s32.totalorder %s27, 0
        // Predicated region
        $region45: #{tpu_custom_call.1} parent=39 // pred_check
          %p256 = pneg %p255
        $region46: #{tpu_custom_call.1} parent=39 // pred_check_branch
          %258 = sbr.rel (%p256) target = $region48
        $region47: #{tpu_custom_call.1} parent=39 // pred_region
          %259 = vst [vmem:[#allocation2] sm:$0xf] 0.0
        $region48: #{tpu_custom_call.1} parent=39 // pred_fallthru
          _
        %v260 = vld [vmem:[#allocation2] sm:$0xf]
        %v261 = vld [vmem:[%s229] sm:$0xf]
        %v262 = vadd.f32 %v260, %v261
        %263 = vst [vmem:[#allocation2] sm:$0xf] %v262
        %p264 = scmp.eq.s32.totalorder %s27, 1
        // Predicated region
        $region49: #{tpu_custom_call.1} parent=39 // pred_check
          %p265 = pneg %p264
        $region50: #{tpu_custom_call.1} parent=39 // pred_check_branch
          %267 = sbr.rel (%p265) target = $region52
        $region51: #{tpu_custom_call.1} parent=39 // pred_region
          %v268 = vld [vmem:[#allocation2] sm:$0xf]
          %vm269 = vcmask 1043456
          %v270 = vsel %vm269, %v268, 0.0
          %271 = vadd.xlane.f32.xlu0 %v270
          %v272 = vpop.xlane.xlu0 %271
          %v273 = vmul.f32 %v272, 0.00390625
          %v274 = vld [vmem:[%s1] sm:$0xf]
          %v275 = vld [vmem:[%s2] sm:$0x1]
          %v277 = vlaneseq
          %v278 = vand.u32 %v277, 127
          %v279 = vlaneseq
          %v280 = vshrl.u32 %v279, 7
          %v281 = vsub.s32 %v278, %v280
          %v282 = vrot.slane %v273, %v281
          %vm283 = vcmask 31744
          %v284 = vsel %vm283, %v282, 0
          %v287 = vsel %vm269, %v274, 0
          %289 = vmatprep.subr.mxu0 0.0
          %290 = vmatpush1.msra.mxu0 0.0
          %291 = vmatprep.subr.mxu0 0.0
          %292 = vmatpush1.msra.mxu0 0.0
          %293 = vmatprep.subr.mxu0 0.0
          %294 = vmatpush1.msra.mxu0 0.0
          %295 = vmatprep.subr.mxu0 0.0
          %296 = vmatpush1.msra.mxu0 0.0
          %297 = vmatprep.subr.mxu0 0.0
          %298 = vmatpush1.msra.mxu0 0.0
          %299 = vmatprep.subr.mxu0 0.0
          %300 = vmatpush1.msra.mxu0 0.0
          %301 = vmatprep.subr.mxu0 0.0
          %302 = vmatpush1.msra.mxu0 0.0
          %303 = vmatprep.subr.mxu0 0.0
          %304 = vmatpush1.msra.mxu0 0.0
          %305 = vmatprep.subr.mxu0 0.0
          %306 = vmatpush1.msra.mxu0 0.0
          %307 = vmatprep.subr.mxu0 0.0
          %308 = vmatpush1.msra.mxu0 0.0
          %309 = vmatprep.subr.mxu0 0.0
          %310 = vmatpush1.msra.mxu0 0.0
          %311 = vmatprep.subr.mxu0 0.0
          %312 = vmatpush1.msra.mxu0 0.0
          %313 = vmatprep.subr.mxu0 0.0
          %314 = vmatpush1.msra.mxu0 0.0
          %315 = vmatprep.subr.mxu0 0.0
          %316 = vmatpush1.msra.mxu0 0.0
          %317 = vmatprep.subr.mxu0 0.0
          %318 = vmatpush1.msra.mxu0 0.0
          %319 = vmatprep.subr.mxu0 0.0
          %320 = vmatpush1.msra.mxu0 %v287
          %321 = vmatprep.subr.mxu0 0.0
          %322 = vmatpush2.msra.mxu0 0.0
          %323 = vmatprep.subr.mxu0 0.0
          %324 = vmatpush2.msra.mxu0 0.0
          %325 = vmatprep.subr.mxu0 0.0
          %326 = vmatpush2.msra.mxu0 0.0
          %327 = vmatprep.subr.mxu0 0.0
          %328 = vmatpush2.msra.mxu0 0.0
          %329 = vmatprep.subr.mxu0 0.0
          %330 = vmatpush2.msra.mxu0 0.0
          %331 = vmatprep.subr.mxu0 0.0
          %332 = vmatpush2.msra.mxu0 0.0
          %333 = vmatprep.subr.mxu0 0.0
          %334 = vmatpush2.msra.mxu0 0.0
          %335 = vmatprep.subr.mxu0 0.0
          %336 = vmatpush2.msra.mxu0 0.0
          %337 = vmatprep.subr.mxu0 0.0
          %338 = vmatpush2.msra.mxu0 0.0
          %339 = vmatprep.subr.mxu0 0.0
          %340 = vmatpush2.msra.mxu0 0.0
          %341 = vmatprep.subr.mxu0 0.0
          %342 = vmatpush2.msra.mxu0 0.0
          %343 = vmatprep.subr.mxu0 0.0
          %344 = vmatpush2.msra.mxu0 0.0
          %345 = vmatprep.subr.mxu0 0.0
          %346 = vmatpush2.msra.mxu0 0.0
          %347 = vmatprep.subr.mxu0 0.0
          %348 = vmatpush2.msra.mxu0 0.0
          %349 = vmatprep.subr.mxu0 0.0
          %350 = vmatpush2.msra.mxu0 0.0
          %351 = vmatprep.subr.mxu0 0.0
          %352 = vmatpush2.msra.mxu0 0.0
          %353 = vmatprep.mubr.f32.mxu0 0.0
          %354 = vmatmul.mubr.f32.gmra.mxu0 %v284
          %v355 = vpop.f32.mrf.mxu0
          %v356 = vadd.f32 %v275, %v355
          %v357 = vpop.f32.mrf.mxu0
          %358 = vdwg.mxu0
          %v359 = vmax.f32 %v356, 0.0
          %v360 = vld [vmem:[%s3] sm:$0x3]
          %v361 = vld [vmem:[%s4] sm:$0x1]
          %vm362 = vcmask 15360
          %v364 = vsel %vm362, %v359, 0
          %vm366 = vcmask 1041408
          %v368 = vsel %vm366, %v360, 0
          %370 = vmatprep.subr.mxu0 0.0
          %371 = vmatpush1.msra.mxu0 0.0
          %372 = vmatprep.subr.mxu0 0.0
          %373 = vmatpush1.msra.mxu0 0.0
          %374 = vmatprep.subr.mxu0 0.0
          %375 = vmatpush1.msra.mxu0 0.0
          %376 = vmatprep.subr.mxu0 0.0
          %377 = vmatpush1.msra.mxu0 0.0
          %378 = vmatprep.subr.mxu0 0.0
          %379 = vmatpush1.msra.mxu0 0.0
          %380 = vmatprep.subr.mxu0 0.0
          %381 = vmatpush1.msra.mxu0 0.0
          %382 = vmatprep.subr.mxu0 0.0
          %383 = vmatpush1.msra.mxu0 0.0
          %384 = vmatprep.subr.mxu0 0.0
          %385 = vmatpush1.msra.mxu0 0.0
          %386 = vmatprep.subr.mxu0 0.0
          %387 = vmatpush1.msra.mxu0 0.0
          %388 = vmatprep.subr.mxu0 0.0
          %389 = vmatpush1.msra.mxu0 0.0
          %390 = vmatprep.subr.mxu0 0.0
          %391 = vmatpush1.msra.mxu0 0.0
          %392 = vmatprep.subr.mxu0 0.0
          %393 = vmatpush1.msra.mxu0 0.0
          %394 = vmatprep.subr.mxu0 0.0
          %395 = vmatpush1.msra.mxu0 0.0
          %396 = vmatprep.subr.mxu0 0.0
          %397 = vmatpush1.msra.mxu0 0.0
          %398 = vmatprep.subr.mxu0 0.0
          %399 = vmatpush1.msra.mxu0 0.0
          %400 = vmatprep.subr.mxu0 0.0
          %401 = vmatpush1.msra.mxu0 %v368
          %402 = vmatprep.subr.mxu0 0.0
          %403 = vmatpush2.msra.mxu0 0.0
          %404 = vmatprep.subr.mxu0 0.0
          %405 = vmatpush2.msra.mxu0 0.0
          %406 = vmatprep.subr.mxu0 0.0
          %407 = vmatpush2.msra.mxu0 0.0
          %408 = vmatprep.subr.mxu0 0.0
          %409 = vmatpush2.msra.mxu0 0.0
          %410 = vmatprep.subr.mxu0 0.0
          %411 = vmatpush2.msra.mxu0 0.0
          %412 = vmatprep.subr.mxu0 0.0
          %413 = vmatpush2.msra.mxu0 0.0
          %414 = vmatprep.subr.mxu0 0.0
          %415 = vmatpush2.msra.mxu0 0.0
          %416 = vmatprep.subr.mxu0 0.0
          %417 = vmatpush2.msra.mxu0 0.0
          %418 = vmatprep.subr.mxu0 0.0
          %419 = vmatpush2.msra.mxu0 0.0
          %420 = vmatprep.subr.mxu0 0.0
          %421 = vmatpush2.msra.mxu0 0.0
          %422 = vmatprep.subr.mxu0 0.0
          %423 = vmatpush2.msra.mxu0 0.0
          %424 = vmatprep.subr.mxu0 0.0
          %425 = vmatpush2.msra.mxu0 0.0
          %426 = vmatprep.subr.mxu0 0.0
          %427 = vmatpush2.msra.mxu0 0.0
          %428 = vmatprep.subr.mxu0 0.0
          %429 = vmatpush2.msra.mxu0 0.0
          %430 = vmatprep.subr.mxu0 0.0
          %431 = vmatpush2.msra.mxu0 0.0
          %432 = vmatprep.subr.mxu0 0.0
          %433 = vmatpush2.msra.mxu0 0.0
          %434 = vmatprep.mubr.f32.mxu0 0.0
          %435 = vmatmul.mubr.f32.gmra.mxu0 %v364
          %v436 = vpop.f32.mrf.mxu0
          %v437 = vadd.f32 %v361, %v436
          %v438 = vpop.f32.mrf.mxu0
          %439 = vdwg.mxu0
          %v440 = vxor.u32 %v437, 2147483648
          %v441 = vmul.f32 %v440, 1.442695
          %v442 = vpow.pop %v441
          %v443 = vadd.f32 %v442, 1.0
          %v444 = vrcp.pop %v443
          %v445 = vmul.f32 1.0, %v444
          %vm446 = vcmask 253952
          %447 = vst.msk [vmem:[%s254] sm:$0x1] %vm446, %v445
        $region52: #{tpu_custom_call.1} parent=39 // pred_fallthru
          _
        %s448 = sand.u32 %s154, 1
        %s449 = scalar_lea.sflag [#allocation5], %s448
        %s450 = sand.u32 %s154, 1
        %s451 = scalar_lea.vmem [#allocation6], %s450
        // Predicated region
        $region53: #{tpu_custom_call.1} parent=39 // pred_check
          %p452 = pneg %p164
        $region54: #{tpu_custom_call.1} parent=39 // pred_check_branch
          %454 = sbr.rel (%p452) target = $region56
        $region55: #{tpu_custom_call.1} parent=39 // pred_region
          %s456 = ssub.s32 16, 16
          %457 = vsyncadd %s449, %s456
          %s458 = smul.addr %s26, 16
          %s459 = scalar_lea.hbm %s5, %s458
          %s461 = sshll.u32 %s451, 4
          %s462 = int_to_ptr.vmem [resolvable:$true] %s461
          %464 = dma.vmem_to_hbm [thread:$0]  %s462, 16, %s459, %s449
        $region56: #{tpu_custom_call.1} parent=39 // pred_fallthru
          _
      $region40: #{tpu_custom_call.1} parent=5 // pred_fallthru
        _
      %p465 = scmp.le.s32.totalorder 2, %s17
      // Predicated region
      $region57: #{tpu_custom_call.1} parent=5 // pred_check
        %p466 = pneg %p465
      $region58: #{tpu_custom_call.1} parent=5 // pred_check_branch
        %468 = sbr.rel (%p466) target = $region60
      $region59: #{tpu_custom_call.1} parent=5 // pred_region
        %s469 = ssub.s32 %s17, 2
        // Predicated region
        $region61: #{tpu_custom_call.1} parent=59 // pred_check
          %p470 = pneg %p170
        $region62: #{tpu_custom_call.1} parent=59 // pred_check_branch
          %472 = sbr.rel (%p470) target = $region64
        $region63: #{tpu_custom_call.1} parent=59 // pred_region
          %s473 = sand.u32 %s155, 1
          %s474 = scalar_lea.sflag [#allocation5], %s473
          %s475 = sand.u32 %s155, 1
          %s476 = scalar_lea.vmem [#allocation6], %s475
          %477 = dma.done %s474, 16
        $region64: #{tpu_custom_call.1} parent=59 // pred_fallthru
          _
      $region60: #{tpu_custom_call.1} parent=5 // pred_fallthru
        _
    $region6: #{tpu_custom_call.1} parent=1 // loop_footer
      %s21 = sadd.s32 1, %s17
    $region7: #{tpu_custom_call.1} parent=1 // loop_footer_branch
      %16 = sbr.rel target = $region3
    $region8: #{tpu_custom_call.1} parent=1 // loop_exit
      _
    %478 = vsyncpa [#allocation4], 1
    %s479 = scalar_lea.sflag [#allocation4], 1
    %480 = vsyncpa %s479, 1
    %481 = vsyncpa [#allocation5], 1
    %s482 = scalar_lea.sflag [#allocation5], 1
    %483 = vsyncpa %s482, 1

</llo_original>
